<compile_context>
chip_gen: v5e
topology: v5e:2x2
jax: 0.10.0
libtpu: 0.0.40
codegen_flags: <defaults>
</compile_context>

<pallas_src>
import math
import functools

import jax
import jax.numpy as jnp
from jax.experimental import pallas as pl
from jax.experimental.pallas import tpu as pltpu


# ----------------------------------------------------------------------------
# In-kernel math helpers
# ----------------------------------------------------------------------------
def _gelu(x):
    # tanh approximation of GELU (one EUP tanh + a few muls).
    # TODO(synk): PyTorch F.gelu default is exact erf; tanh approx differs by ~3e-4 max.
    c = 0.7978845608028654  # sqrt(2/pi)
    return 0.5 * x * (1.0 + jnp.tanh(c * (x + 0.044715 * x * x * x)))


def _pick_tile(dim, target, align):
    """Largest tile <= target that evenly divides `dim` and respects TPU alignment."""
    if dim <= target:
        return dim
    t = (target // align) * align
    while t >= align:
        if dim % t == 0:
            return t
        t -= align
    return dim


# ----------------------------------------------------------------------------
# Fused matmul kernel:  y = [residual +] [gelu]( LN?(x) @ w + b )
# ----------------------------------------------------------------------------
def _mm_kernel(*refs, nk, has_ln, has_res, act):
    it = iter(refs)
    x_ref = next(it)
    w_ref = next(it)
    b_ref = next(it)
    g_ref = next(it) if has_ln else None
    gb_ref = next(it) if has_ln else None
    r_ref = next(it) if has_res else None
    o_ref = next(it)
    acc_ref = next(it)

    kk = pl.program_id(2)

    @pl.when(kk == 0)
    def _():
        acc_ref[...] = jnp.zeros_like(acc_ref)

    x = x_ref[...]
    if has_ln:
        # Pre-norm LayerNorm fused as matmul prologue (requires full K resident: nk == 1).
        mu = jnp.mean(x, axis=-1, keepdims=True)
        xc = x - mu
        var = jnp.mean(xc * xc, axis=-1, keepdims=True)  # biased variance (PyTorch LayerNorm)
        x = xc * jax.lax.rsqrt(var + 1e-5) * g_ref[...] + gb_ref[...]

    acc_ref[...] += jnp.dot(x, w_ref[...], preferred_element_type=jnp.float32)

    @pl.when(kk == nk - 1)
    def _():
        y = acc_ref[...] + b_ref[...]
        if act == "gelu":
            y = _gelu(y)
        if has_res:
            y = y + r_ref[...]
        o_ref[...] = y


def fused_matmul(x, w, b, *, ln=None, residual=None, act=None,
                 tm=256, tn=256, tk=512):
    """y = [residual +] [gelu]( LN?(x) @ w + b ).  x:(M,K), w:(K,N), b:(1,N)."""
    m, k = x.shape
    n = w.shape[1]
    has_ln = ln is not None
    has_res = residual is not None
    if has_ln:
        tk = k  # LayerNorm needs the full feature dim resident in one K block.

    tm = _pick_tile(m, tm, 8)
    tn = _pick_tile(n, tn, 128)
    tk = _pick_tile(k, tk, 128)
    nm, nn, nk = m // tm, n // tn, k // tk

    kern = functools.partial(_mm_kernel, nk=nk, has_ln=has_ln, has_res=has_res, act=act)

    in_specs = [
        pl.BlockSpec((tm, tk), lambda i, j, kk: (i, kk)),
        pl.BlockSpec((tk, tn), lambda i, j, kk: (kk, j)),
        pl.BlockSpec((1, tn), lambda i, j, kk: (0, j)),
    ]
    inputs = [x, w, b]
    if has_ln:
        g, gb = ln
        in_specs += [pl.BlockSpec((1, tk), lambda i, j, kk: (0, kk)),
                     pl.BlockSpec((1, tk), lambda i, j, kk: (0, kk))]
        inputs += [g, gb]
    if has_res:
        in_specs += [pl.BlockSpec((tm, tn), lambda i, j, kk: (i, j))]
        inputs += [residual]

    flops = 2 * m * n * k
    trans = m * n if act == "gelu" else 0
    bytes_acc = 4 * (m * k + k * n + m * n + n
                     + (m * n if has_res else 0) + (2 * k if has_ln else 0))

    return pl.pallas_call(
        kern,
        out_shape=jax.ShapeDtypeStruct((m, n), jnp.float32),
        grid=(nm, nn, nk),
        in_specs=in_specs,
        out_specs=pl.BlockSpec((tm, tn), lambda i, j, kk: (i, j)),
        scratch_shapes=[pltpu.VMEM((tm, tn), jnp.float32)],
        compiler_params=pltpu.CompilerParams(
            dimension_semantics=("parallel", "parallel", "arbitrary"),
            vmem_limit_bytes=64 * 1024 * 1024),
        cost_estimate=pl.CostEstimate(
            flops=flops, transcendentals=trans, bytes_accessed=bytes_acc),
    )(*inputs)


# ----------------------------------------------------------------------------
# Standalone tiled LayerNorm (final norm only; all other LNs are fused into matmuls)
# ----------------------------------------------------------------------------
def _ln_kernel(x_ref, g_ref, b_ref, o_ref):
    x = x_ref[...]
    mu = jnp.mean(x, axis=-1, keepdims=True)
    xc = x - mu
    var = jnp.mean(xc * xc, axis=-1, keepdims=True)
    o_ref[...] = xc * jax.lax.rsqrt(var + 1e-5) * g_ref[...] + b_ref[...]


def layernorm(x, g, b, tm=256):
    m, d = x.shape
    tm = _pick_tile(m, tm, 8)
    return pl.pallas_call(
        _ln_kernel,
        out_shape=jax.ShapeDtypeStruct((m, d), jnp.float32),
        grid=(m // tm,),
        in_specs=[pl.BlockSpec((tm, d), lambda i: (i, 0)),
                  pl.BlockSpec((1, d), lambda i: (0, 0)),
                  pl.BlockSpec((1, d), lambda i: (0, 0))],
        out_specs=pl.BlockSpec((tm, d), lambda i: (i, 0)),
        compiler_params=pltpu.CompilerParams(dimension_semantics=("parallel",)),
    )(x, g, b)


# ----------------------------------------------------------------------------
# Attention kernel: grid over batch, heads looped in-kernel, lane-dense (L, H*E) output,
# causal+pad mask generated in-kernel from iota + (B, L) key-pad row.
# ----------------------------------------------------------------------------
def _attention_kernel(qkv_ref, pad_ref, o_ref, *, n_heads, scale):
    L = qkv_ref.shape[0]
    d3 = qkv_ref.shape[1]
    d = d3 // 3
    e = d // n_heads

    qkv = qkv_ref[...]
    q = qkv[:, 0:d]
    k = qkv[:, d:2 * d]
    v = qkv[:, 2 * d:3 * d]

    # causal OR key-pad mask, built in-kernel (no (L,L) DMA).  True == masked.
    row = jax.lax.broadcasted_iota(jnp.int32, (L, L), 0)
    col = jax.lax.broadcasted_iota(jnp.int32, (L, L), 1)
    causal = col > row
    pad = pad_ref[...] > 0.5                 # (1, L) over keys
    masked = jnp.logical_or(causal, pad)     # (L, L)

    outs = []
    for h in range(n_heads):
        qh = q[:, h * e:(h + 1) * e]
        kh = k[:, h * e:(h + 1) * e]
        vh = v[:, h * e:(h + 1) * e]
        s = jax.lax.dot_general(qh, kh, (((1,), (1,)), ((), ())),
                                preferred_element_type=jnp.float32)   # (L, S)
        s = jnp.where(masked, -jnp.inf, s)   # masked_fill_(-inf) BEFORE scaling
        s = s * scale                        # softmax(scale * scores)
        smax = jnp.max(s, axis=-1, keepdims=True)
        p = jnp.exp(s - smax)
        denom = jnp.sum(p, axis=-1, keepdims=True)
        a = p * pl.reciprocal(denom, approx=True)
        a = jnp.where(jnp.isnan(a), 0.0, a)  # torch.nan_to_num (fully-masked rows)
        outs.append(jax.lax.dot_general(a, vh, (((1,), (0,)), ((), ())),
                                        preferred_element_type=jnp.float32))
    # single lane-dense store:  'b l h e -> b l (h e)'
    o_ref[...] = jnp.concatenate(outs, axis=-1)


def attention(qkv, pad_row, n_heads):
    """qkv: (B, L, 3D) packed projections; pad_row: (B, 1, L) float (1=padded key)."""
    b, l, d3 = qkv.shape
    d = d3 // 3
    e = d // n_heads
    kern = functools.partial(_attention_kernel, n_heads=n_heads, scale=1.0 / math.sqrt(e))
    return pl.pallas_call(
        kern,
        out_shape=jax.ShapeDtypeStruct((b, l, d), jnp.float32),
        grid=(b,),
        in_specs=[
            pl.BlockSpec((None, l, d3), lambda bi: (bi, 0, 0)),
            pl.BlockSpec((None, 1, l), lambda bi: (bi, 0, 0)),
        ],
        out_specs=pl.BlockSpec((None, l, d), lambda bi: (bi, 0, 0)),
        compiler_params=pltpu.CompilerParams(dimension_semantics=("parallel",)),
        cost_estimate=pl.CostEstimate(
            flops=4 * b * n_heads * l * l * e,
            transcendentals=b * n_heads * l * l,
            bytes_accessed=4 * (b * l * d3 + b * l * d + b * l)),
    )(qkv, pad_row)


# ----------------------------------------------------------------------------
# Parameter init (deterministic, synthetic)
# ----------------------------------------------------------------------------
def _init_linear(key, din, dout):
    kw, kb = jax.random.split(key)
    bound = 1.0 / math.sqrt(din)
    w = jax.random.uniform(kw, (din, dout), jnp.float32, -bound, bound)
    b = jax.random.uniform(kb, (1, dout), jnp.float32, -bound, bound)
    return w, b


def init_params(key, input_dim, max_seq_len, d_model, d_ff, n_heads, n_layers):
    keys = jax.random.split(key, 3 + n_layers)
    params = {}
    params["pos_emb"] = jax.random.normal(keys[0], (max_seq_len, d_model), jnp.float32)
    params["ff1_w"], params["ff1_b"] = _init_linear(keys[1], input_dim, d_model)
    params["ff2_w"], params["ff2_b"] = _init_linear(keys[2], d_model, d_model)
    params["norm_g"] = jnp.ones((1, d_model), jnp.float32)
    params["norm_b"] = jnp.zeros((1, d_model), jnp.float32)
    layers = []
    for li in range(n_layers):
        lk = jax.random.split(keys[3 + li], 6)
        p = {}
        wq, bq = _init_linear(lk[0], d_model, d_model)
        wk, bk = _init_linear(lk[1], d_model, d_model)
        wv, bv = _init_linear(lk[2], d_model, d_model)
        # fused QKV projection weight: (D, 3D)
        p["wqkv"] = jnp.concatenate([wq, wk, wv], axis=1)
        p["bqkv"] = jnp.concatenate([bq, bk, bv], axis=1)
        p["wo"], p["bo"] = _init_linear(lk[3], d_model, d_model)
        p["ffa_w"], p["ffa_b"] = _init_linear(lk[4], d_model, d_ff)
        p["ffb_w"], p["ffb_b"] = _init_linear(lk[5], d_ff, d_model)
        p["n1_g"] = jnp.ones((1, d_model), jnp.float32)
        p["n1_b"] = jnp.zeros((1, d_model), jnp.float32)
        p["n3_g"] = jnp.ones((1, d_model), jnp.float32)
        p["n3_b"] = jnp.zeros((1, d_model), jnp.float32)
        layers.append(p)
    params["layers"] = layers
    return params


# ----------------------------------------------------------------------------
# Forward pass (thin glue in JAX; all heavy lifting in the fused Pallas kernels)
# ----------------------------------------------------------------------------
def transformer_layer(x2, pad_row, p, n_heads, b, l):
    d = x2.shape[1]
    # pre-norm self-attention: LN fused into QKV matmul, residual fused into Wo matmul
    qkv = fused_matmul(x2, p["wqkv"], p["bqkv"], ln=(p["n1_g"], p["n1_b"]))   # (B*L, 3D)
    attn = attention(qkv.reshape(b, l, 3 * d), pad_row, n_heads)              # (B, L, D)
    x2 = fused_matmul(attn.reshape(b * l, d), p["wo"], p["bo"], residual=x2)

    # pre-norm feed-forward: LN+GELU fused into up-proj, residual fused into down-proj
    f = fused_matmul(x2, p["ffa_w"], p["ffa_b"], ln=(p["n3_g"], p["n3_b"]), act="gelu")
    x2 = fused_matmul(f, p["ffb_w"], p["ffb_b"], residual=x2)
    return x2


def encoder_forward(params, states, key_pad_mask, n_heads):
    """states: (B, L, input_dim); key_pad_mask: (B, L) bool, True == padded key position."""
    b, l, din = states.shape
    d = params["ff1_w"].shape[1]

    pos_emb = params["pos_emb"][:l]                                           # (L, D)
    pos_res = jnp.broadcast_to(pos_emb[None, :, :], (b, l, d)).reshape(b * l, d)

    x2 = states.reshape(b * l, din)
    traj = fused_matmul(x2, params["ff1_w"], params["ff1_b"], act="gelu")
    traj = fused_matmul(traj, params["ff2_w"], params["ff2_b"], residual=pos_res)

    # TODO(synk): a fully general (B, L, L) attn_mask is not supported here; the causal part
    #             is generated in-kernel and only a (B, L) key-padding row is passed.
    pad_row = key_pad_mask.astype(jnp.float32).reshape(b, 1, l)

    for p in params["layers"]:
        traj = transformer_layer(traj, pad_row, p, n_heads, b, l)

    out = layernorm(traj, params["norm_g"], params["norm_b"])
    return out.reshape(b, l, d)


# ----------------------------------------------------------------------------
if __name__ == "__main__":
    B, L, INPUT_DIM = 2, 8, 6
    D_MODEL, D_FF, N_HEADS, N_LAYERS = 32, 64, 4, 2

    key = jax.random.PRNGKey(0)
    params = init_params(key, INPUT_DIM, L, D_MODEL, D_FF, N_HEADS, N_LAYERS)

    states = jax.random.normal(jax.random.fold_in(key, 123), (B, L, INPUT_DIM), jnp.float32)
    # key padding: last two key positions of batch 1 are padding
    key_pad = jnp.zeros((B, L), dtype=bool).at[1, L - 2:].set(True)

    out = encoder_forward(params, states, key_pad, n_heads=N_HEADS)
    out = jax.block_until_ready(out)

    assert out.shape == (B, L, D_MODEL), out.shape
    assert bool(jnp.all(jnp.isfinite(out)))
    print("KERNEL_OK")
</pallas_src>

<mosaic_0001>
module attributes {stable_mosaic.version = 11 : i64} {
  func.func @_mm_kernel(%arg0: i32, %arg1: i32, %arg2: i32, %arg3: memref<16x6xf32, #tpu.memory_space<vmem>>, %arg4: memref<6x32xf32, #tpu.memory_space<vmem>>, %arg5: memref<1x32xf32, #tpu.memory_space<vmem>>, %arg6: memref<16x32xf32, #tpu.memory_space<vmem>>, %arg7: memref<16x32xf32, #tpu.memory_space<vmem>>) attributes {dimension_semantics = [#tpu.dimension_semantics<parallel>, #tpu.dimension_semantics<parallel>, #tpu.dimension_semantics<arbitrary>], iteration_bounds = array<i64: 1, 1, 1>, scalar_prefetch = 0 : i64, scratch_operands = 1 : i64, tpu.core_type = #tpu.core_type<tc>, window_params = [{transform_indices = @transform_0, window_bounds = array<i64: 16, 6>}, {transform_indices = @transform_1, window_bounds = array<i64: 6, 32>}, {transform_indices = @transform_2, window_bounds = array<i64: 1, 32>}, {transform_indices = @transform_3, window_bounds = array<i64: 16, 32>}]} {
    %c0_i32 = arith.constant 0 : i32
    %0 = arith.cmpi eq, %arg2, %c0_i32 : i32
    %1 = arith.extui %0 : i1 to i32
    %c0_i32_0 = arith.constant 0 : i32
    %2 = arith.cmpi ne, %1, %c0_i32_0 : i32
    scf.if %2 {
      %cst_10 = arith.constant 0.000000e+00 : f32
      %12 = vector.broadcast %cst_10 : f32 to vector<16x32xf32>
      %c0_11 = arith.constant 0 : index
      %c0_12 = arith.constant 0 : index
      %13 = vector.load %arg7[%c0_11, %c0_12] : memref<16x32xf32, #tpu.memory_space<vmem>>, vector<16x32xf32>
      tpu.vector_store %arg7[%c0_11, %c0_12], %12 {strides = array<i32>} : memref<16x32xf32, #tpu.memory_space<vmem>>, vector<16x32xf32>,
    } else {
    }
    %c0 = arith.constant 0 : index
    %c0_1 = arith.constant 0 : index
    %3 = vector.load %arg3[%c0, %c0_1] : memref<16x6xf32, #tpu.memory_space<vmem>>, vector<16x6xf32>
    %c0_2 = arith.constant 0 : index
    %c0_3 = arith.constant 0 : index
    %4 = vector.load %arg7[%c0_2, %c0_3] : memref<16x32xf32, #tpu.memory_space<vmem>>, vector<16x32xf32>
    %c0_4 = arith.constant 0 : index
    %c0_5 = arith.constant 0 : index
    %5 = vector.load %arg4[%c0_4, %c0_5] : memref<6x32xf32, #tpu.memory_space<vmem>>, vector<6x32xf32>
    %cst = arith.constant dense<0.000000e+00> : vector<16x32xf32>
    %6 = tpu.matmul %3, %5, %cst {dimension_numbers = #tpu.dot_dimension_numbers<[1], [0], [0], [1], [0, 0, 1, 1], [], []>} : vector<16x6xf32>, vector<6x32xf32>, vector<16x32xf32> -> vector<16x32xf32>
    %7 = arith.addf %4, %6 : vector<16x32xf32>
    %c0_6 = arith.constant 0 : index
    %c0_7 = arith.constant 0 : index
    %8 = vector.load %arg7[%c0_6, %c0_7] : memref<16x32xf32, #tpu.memory_space<vmem>>, vector<16x32xf32>
    tpu.vector_store %arg7[%c0_6, %c0_7], %7 {strides = array<i32>} : memref<16x32xf32, #tpu.memory_space<vmem>>, vector<16x32xf32>,
    %c0_i32_8 = arith.constant 0 : i32
    %9 = arith.cmpi eq, %arg2, %c0_i32_8 : i32
    %10 = arith.extui %9 : i1 to i32
    %c0_i32_9 = arith.constant 0 : i32
    %11 = arith.cmpi ne, %10, %c0_i32_9 : i32
    scf.if %11 {
      %c0_10 = arith.constant 0 : index
      %c0_11 = arith.constant 0 : index
      %12 = vector.load %arg7[%c0_10, %c0_11] : memref<16x32xf32, #tpu.memory_space<vmem>>, vector<16x32xf32>
      %c0_12 = arith.constant 0 : index
      %c0_13 = arith.constant 0 : index
      %13 = vector.load %arg5[%c0_12, %c0_13] : memref<1x32xf32, #tpu.memory_space<vmem>>, vector<1x32xf32>
      %14 = vector.broadcast %13 : vector<1x32xf32> to vector<16x32xf32>
      %15 = arith.addf %12, %14 : vector<16x32xf32>
      %cst_14 = arith.constant 5.000000e-01 : f32
      %16 = vector.broadcast %cst_14 : f32 to vector<16x32xf32>
      %17 = arith.mulf %16, %15 : vector<16x32xf32>
      %cst_15 = arith.constant 4.471500e-02 : f32
      %18 = vector.broadcast %cst_15 : f32 to vector<16x32xf32>
      %19 = arith.mulf %18, %15 : vector<16x32xf32>
      %20 = arith.mulf %19, %15 : vector<16x32xf32>
      %21 = arith.mulf %20, %15 : vector<16x32xf32>
      %22 = arith.addf %15, %21 : vector<16x32xf32>
      %cst_16 = arith.constant 0.797884583 : f32
      %23 = vector.broadcast %cst_16 : f32 to vector<16x32xf32>
      %24 = arith.mulf %23, %22 : vector<16x32xf32>
      %25 = math.tanh %24 : vector<16x32xf32>
      %cst_17 = arith.constant 1.000000e+00 : f32
      %26 = vector.broadcast %cst_17 : f32 to vector<16x32xf32>
      %27 = arith.addf %26, %25 : vector<16x32xf32>
      %28 = arith.mulf %17, %27 : vector<16x32xf32>
      %c0_18 = arith.constant 0 : index
      %c0_19 = arith.constant 0 : index
      %29 = vector.load %arg6[%c0_18, %c0_19] : memref<16x32xf32, #tpu.memory_space<vmem>>, vector<16x32xf32>
      tpu.vector_store %arg6[%c0_18, %c0_19], %28 {strides = array<i32>} : memref<16x32xf32, #tpu.memory_space<vmem>>, vector<16x32xf32>,
    } else {
    }
    return
  }
  func.func @transform_0(%arg0: i32, %arg1: i32, %arg2: i32) -> (i32, i32) {
    %c0_i32 = arith.constant 0 : i32
    return %arg0, %arg2 : i32, i32
  }
  func.func @transform_1(%arg0: i32, %arg1: i32, %arg2: i32) -> (i32, i32) {
    %c0_i32 = arith.constant 0 : i32
    return %arg2, %arg1 : i32, i32
  }
  func.func @transform_2(%arg0: i32, %arg1: i32, %arg2: i32) -> (i32, i32) {
    %c0_i32 = arith.constant 0 : i32
    %c0_i32_0 = arith.constant 0 : i32
    return %c0_i32, %arg1 : i32, i32
  }
  func.func @transform_3(%arg0: i32, %arg1: i32, %arg2: i32) -> (i32, i32) {
    %c0_i32 = arith.constant 0 : i32
    return %arg0, %arg1 : i32, i32
  }
}

</mosaic_0001>

<llo_original>
// kernel: tpu_custom_call.1
$region0: #{tpu_custom_call.1}
  #allocation0 [shape = 'u32[]', space=smem, size = 0x4, offset = 0x4, fixed_abs, tag = 'smem constant byte address 0x4 - core index']
  #allocation1 [shape = 'u32[72,128]{1,0:T(1,128)}', space=vmem, size = 0x9000, scoped, tag = 'internal scratch']
  #allocation2 [shape = 'f32[16,32]{1,0:T(8,128)}', space=vmem, size = 0x2000, scoped, tag = 'scratch operand']
  %s0 = inlined_call_operand.vmem [shape: f32[16,6], index: 0, kind: input, shape index: {}]
  %s1 = inlined_call_operand.vmem [shape: f32[6,32], index: 1, kind: input, shape index: {}]
  %s2 = inlined_call_operand.vmem [shape: f32[1,32], index: 2, kind: input, shape index: {}]
  %s3 = inlined_call_operand.hbm [shape: f32[16,32], index: 3, kind: output, shape index: {}]
  %s4 = sld [smem:[#allocation0]]
  $region30: #{tpu_custom_call.1} parent=0
    _
  %s6 = ssub.s32 1, %s4
  %s7 = scalar_select 0, %s6, %s4
  $region1: #{tpu_custom_call.1} parent=0
    #allocation3 [shape = 'u8[8192]{0}', space=vmem, size = 0x2000, scoped, tag = 'output window, operand 0, single buffered']
    #allocation4 [shape = 's32[1]{0}', space=sflag, size = 0x4, scoped, tag = 'scoped memory for tpu_custom_call.1']
    %8 = vsyncpa [#allocation4], 0
    // Predicated region
    $region2: #{tpu_custom_call.1} parent=1 // pred_check
      _
    $region3: #{tpu_custom_call.1} parent=1 // pred_check_branch
      %10 = sbr.rel (0) target = $region5
    $region4: #{tpu_custom_call.1} parent=1 // pred_region
      _
    $region5: #{tpu_custom_call.1} parent=1 // pred_fallthru
      _
    // Predicated region
    $region6: #{tpu_custom_call.1} parent=1 // pred_check
      _
    $region7: #{tpu_custom_call.1} parent=1 // pred_check_branch
      %12 = sbr.rel (0) target = $region9
    $region8: #{tpu_custom_call.1} parent=1 // pred_region
      _
    $region9: #{tpu_custom_call.1} parent=1 // pred_fallthru
      _
    // Predicated region
    $region10: #{tpu_custom_call.1} parent=1 // pred_check
      _
    $region11: #{tpu_custom_call.1} parent=1 // pred_check_branch
      %14 = sbr.rel (0) target = $region13
    $region12: #{tpu_custom_call.1} parent=1 // pred_region
      _
    $region13: #{tpu_custom_call.1} parent=1 // pred_fallthru
      _
    %p15 = scmp.eq.s32.totalorder 0, 0
    // Predicated region
    $region14: #{tpu_custom_call.1} parent=1 // pred_check
      %p16 = pneg %p15
    $region15: #{tpu_custom_call.1} parent=1 // pred_check_branch
      %18 = sbr.rel (%p16) target = $region17
    $region16: #{tpu_custom_call.1} parent=1 // pred_region
      %vm19 = vcmask 261120
      %20 = vst.msk [vmem:[#allocation2] sm:$0xff] %vm19, 0.0
      %21 = vst.msk [vmem:[#allocation2 + $0x8] sm:$0xff] %vm19, 0.0
    $region17: #{tpu_custom_call.1} parent=1 // pred_fallthru
      _
    %v22 = vld [vmem:[%s0] sm:$0xff]
    %v23 = vld [vmem:[%s0 + $0x8] sm:$0xff]
    %v24 = vld [vmem:[#allocation2] sm:$0xff]
    %v25 = vld [vmem:[#allocation2 + $0x8] sm:$0xff]
    %v26 = vld [vmem:[%s1] sm:$0x3f]
    %vm27 = vcmask 48128
    %v29 = vsel %vm27, %v22, 0
    %v32 = vsel %vm27, %v23, 0
    %vm34 = vcmask 1045504
    %v36 = vsel %vm34, %v26, 0
    %38 = vmatpush.msra.mxu0 0.0
    %39 = vmatpush.msra.mxu0 0.0
    %40 = vmatpush.msra.mxu0 0.0
    %41 = vmatpush.msra.mxu0 0.0
    %42 = vmatpush.msra.mxu0 0.0
    %43 = vmatpush.msra.mxu0 0.0
    %44 = vmatpush.msra.mxu0 0.0
    %45 = vmatpush.msra.mxu0 0.0
    %46 = vmatpush.msra.mxu0 0.0
    %47 = vmatpush.msra.mxu0 0.0
    %48 = vmatpush.msra.mxu0 0.0
    %49 = vmatpush.msra.mxu0 0.0
    %50 = vmatpush.msra.mxu0 0.0
    %51 = vmatpush.msra.mxu0 0.0
    %52 = vmatpush.msra.mxu0 0.0
    %53 = vmatpush.msra.mxu0 %v36
    %54 = vmatmul.f32.gmra.mxu0 %v29
    %v55 = vpop.f32.mrf.mxu0
    %v56 = vadd.f32 0.0, %v55
    %57 = vmatmul.f32.gmra.mxu0 %v32
    %v58 = vpop.f32.mrf.mxu0
    %v59 = vadd.f32 0.0, %v58
    %60 = vdwg.mxu0
    %v61 = vadd.f32 %v24, %v56
    %v62 = vadd.f32 %v25, %v59
    %vm63 = vcmask 261120
    %64 = vst.msk [vmem:[#allocation2] sm:$0xff] %vm63, %v61
    %65 = vst.msk [vmem:[#allocation2 + $0x8] sm:$0xff] %vm63, %v62
    // Predicated region
    $region18: #{tpu_custom_call.1} parent=1 // pred_check
      %p66 = pneg %p15
    $region19: #{tpu_custom_call.1} parent=1 // pred_check_branch
      %68 = sbr.rel (%p66) target = $region21
    $region20: #{tpu_custom_call.1} parent=1 // pred_region
      %v69 = vld [vmem:[#allocation2] sm:$0xff]
      %v70 = vld [vmem:[#allocation2 + $0x8] sm:$0xff]
      %v71 = vld [vmem:[%s2] sm:$0x1]
      %v73 = vperm.slane %v71, 0
      %v75 = vadd.f32 %v69, %v73
      %v76 = vadd.f32 %v70, %v73
      %v77 = vmul.f32 %v75, 0.5
      %v78 = vmul.f32 %v76, 0.5
      %v79 = vmul.f32 %v75, 0.044715
      %v80 = vmul.f32 %v76, 0.044715
      %v81 = vmul.f32 %v79, %v75
      %v82 = vmul.f32 %v80, %v76
      %v83 = vmul.f32 %v81, %v75
      %v84 = vmul.f32 %v82, %v76
      %v85 = vadd.f32 %v75, %v83
      %v86 = vadd.f32 %v76, %v84
      %v87 = vmul.f32 %v85, 0.7978846
      %v88 = vmul.f32 %v86, 0.7978846
      %v89 = vtanh.pop %v87
      %v90 = vtanh.pop %v88
      %v91 = vadd.f32 %v89, 1.0
      %v92 = vadd.f32 %v90, 1.0
      %v93 = vmul.f32 %v77, %v91
      %v94 = vmul.f32 %v78, %v92
      %95 = vst.msk [vmem:[#allocation3] sm:$0xff] %vm63, %v93
      %96 = vst.msk [vmem:[#allocation3 + $0x8] sm:$0xff] %vm63, %v94
    $region21: #{tpu_custom_call.1} parent=1 // pred_fallthru
      _
    // Predicated region
    $region22: #{tpu_custom_call.1} parent=1 // pred_check
      _
    $region23: #{tpu_custom_call.1} parent=1 // pred_check_branch
      %98 = sbr.rel (0) target = $region25
    $region24: #{tpu_custom_call.1} parent=1 // pred_region
      %100 = vsyncadd [#allocation4], 0
      %s101 = sshll.u32 [#allocation3], 4
      %s102 = int_to_ptr.vmem [resolvable:$true] %s101
      %s103 = sshll.u32 %s3, 4
      %s104 = int_to_ptr.hbm [resolvable:$true] %s103
      %109 = dma.vmem_to_hbm [thread:$0]  %s102, 256, %s104, [#allocation4], 128, 128, 8
    $region25: #{tpu_custom_call.1} parent=1 // pred_fallthru
      _
    // Predicated region
    $region26: #{tpu_custom_call.1} parent=1 // pred_check
      _
    $region27: #{tpu_custom_call.1} parent=1 // pred_check_branch
      %111 = sbr.rel (0) target = $region29
    $region28: #{tpu_custom_call.1} parent=1 // pred_region
      %113 = dma.done [#allocation4], 256
    $region29: #{tpu_custom_call.1} parent=1 // pred_fallthru
      _
    %114 = vsyncpa [#allocation4], 1

</llo_original>
